<compile_context>
chip_gen: v7x
topology: tpu7x:2x2x1
jax: 0.10.0
libtpu: 0.0.40
codegen_flags: <defaults>
</compile_context>

<pallas_src>
import functools

import jax
import jax.numpy as jnp
import numpy as np
from jax.experimental import pallas as pl
from jax.experimental.pallas import tpu as pltpu

F1_EPS = 1e-16
_ACC_ROWS = 8   # rows in the per-core partial-sum slab (5 used, 8 = sublane tile)


# ----------------------------------------------------------------------------
# Fused kernel: per-tile boolean masks + per-core partial sums for
# focal / accuracy / soft-F1.
# ----------------------------------------------------------------------------
def _loss_v5_kernel(fc_ref, label_ref,                       # inputs
                    pred_ref, labm_ref, part_ref,            # outputs
                    stp_acc, sfp_acc, sfn_acc, focal_acc, corr_acc,  # scratch
                    *, total_rows, tile_b, nb):
    c = pl.program_id(0)          # core / partition index   ("parallel")
    i = pl.program_id(1)          # batch-tile index          ("arbitrary")

    x = fc_ref[...].astype(jnp.float32)      # (tile_b, C) logits
    y = label_ref[...].astype(jnp.float32)   # (tile_b, C) targets in [0, 1]

    # --- boolean outputs, fused so XLA never re-reads fc / label ------------
    pred = x > 0.0
    labb = y > 0.5
    pred_ref[...] = pred.astype(jnp.int8)
    labm_ref[...] = labb.astype(jnp.int8)

    # --- row-validity mask for the ragged last batch tile --------------------
    tile_idx = c * nb + i
    row = jax.lax.broadcasted_iota(jnp.int32, x.shape, 0) + tile_idx * tile_b
    valid = row < total_rows

    # --- focal pieces: one exp + one log1p per element (sigmoid reuses e) ----
    e = jnp.exp(-jnp.abs(x))                     # EUP #1
    t = 1.0 / (1.0 + e)
    p = jnp.where(x >= 0.0, t, 1.0 - t)          # sigmoid(x)
    a = p * y                                    # shared product (CSE)
    bce = jnp.maximum(x, 0.0) - x * y + jnp.log1p(e)   # EUP #2
    one_m_pt = p + y - 2.0 * a                   # 1 - pt
    focal_e = one_m_pt * one_m_pt * bce          # gamma = 2 -> explicit square

    zero = jnp.zeros_like(x)
    stp_e = jnp.where(valid, a, zero)            # y * p
    sfp_e = jnp.where(valid, p - a, zero)        # (1 - y) * p
    sfn_e = jnp.where(valid, y - a, zero)        # y * (1 - p)
    focal_e = jnp.where(valid, focal_e, zero)
    corr_e = jnp.where(valid & (pred == labb), 1.0, 0.0)

    # --- init per-core f32 accumulators at the first tile --------------------
    @pl.when(i == 0)
    def _():
        stp_acc[...] = jnp.zeros_like(stp_acc)
        sfp_acc[...] = jnp.zeros_like(sfp_acc)
        sfn_acc[...] = jnp.zeros_like(sfn_acc)
        focal_acc[...] = jnp.zeros_like(focal_acc)
        corr_acc[...] = jnp.zeros_like(corr_acc)

    # --- per-class accumulation (sum over this tile's batch rows) ------------
    stp_acc[...] += jnp.sum(stp_e, axis=0, keepdims=True)
    sfp_acc[...] += jnp.sum(sfp_e, axis=0, keepdims=True)
    sfn_acc[...] += jnp.sum(sfn_e, axis=0, keepdims=True)
    focal_acc[...] += jnp.sum(focal_e, axis=0, keepdims=True)
    corr_acc[...] += jnp.sum(corr_e, axis=0, keepdims=True)

    # --- emit this core's partial-sum slab at the last tile ------------------
    @pl.when(i == pl.num_programs(1) - 1)
    def _():
        C = stp_acc.shape[1]
        part_ref[...] = jnp.concatenate(
            [stp_acc[...], sfp_acc[...], sfn_acc[...],
             focal_acc[...], corr_acc[...],
             jnp.zeros((_ACC_ROWS - 5, C), jnp.float32)],
            axis=0)


def _choose_tile_b(B, C, itemsize):
    """Batch-tile size: ~2 MiB per input tile keeps 2 inputs x 2 pipeline
    buffers (+ int8 outputs) far below v7x's default scoped-VMEM limit."""
    if B <= 8:
        return B
    budget = 2 * 1024 * 1024
    rows = max(8, budget // max(1, C * itemsize))
    rows = int(min(rows, 1024, B))
    return max(8, (rows // 8) * 8)


def _loss_v5_stats(fc, label, tile_b=None):
    """One fused pallas_call -> (focal, acc, f1_loss, pred_mask_i8, label_mask_i8)."""
    B, C = fc.shape
    itemsize = max(jnp.dtype(fc.dtype).itemsize, jnp.dtype(label.dtype).itemsize)
    if tile_b is None:
        tile_b = _choose_tile_b(B, C, itemsize)
    nb_total = pl.cdiv(B, tile_b)

    # Split the batch tiles across the 2 TensorCores of a v7x chip when the
    # tile count divides evenly; on 1-TC chips this axis iterates serially.
    ncores = 2 if (nb_total >= 2 and nb_total % 2 == 0) else 1
    nb = nb_total // ncores

    idx = lambda c, i: (c * nb + i, 0)
    kernel = functools.partial(_loss_v5_kernel,
                               total_rows=B, tile_b=tile_b, nb=nb)

    grid_spec = pltpu.PrefetchScalarGridSpec(
        num_scalar_prefetch=0,
        grid=(ncores, nb),
        in_specs=[pl.BlockSpec((tile_b, C), idx),
                  pl.BlockSpec((tile_b, C), idx)],
        out_specs=[pl.BlockSpec((tile_b, C), idx),                     # fc > 0
                   pl.BlockSpec((tile_b, C), idx),                     # label > 0.5
                   pl.BlockSpec((_ACC_ROWS, C), lambda c, i: (c, 0))], # partial sums
        scratch_shapes=[pltpu.VMEM((1, C), jnp.float32)] * 5,
    )

    n = B * C
    cost = pl.CostEstimate(
        flops=25 * n,
        transcendentals=2 * n,
        bytes_accessed=int(n * jnp.dtype(fc.dtype).itemsize
                           + n * jnp.dtype(label.dtype).itemsize
                           + 2 * n + ncores * _ACC_ROWS * C * 4))

    pred_i8, lab_i8, parts = pl.pallas_call(
        kernel,
        out_shape=(jax.ShapeDtypeStruct((B, C), jnp.int8),
                   jax.ShapeDtypeStruct((B, C), jnp.int8),
                   jax.ShapeDtypeStruct((ncores * _ACC_ROWS, C), jnp.float32)),
        grid_spec=grid_spec,
        compiler_params=pltpu.CompilerParams(
            dimension_semantics=("parallel", "arbitrary")),
        cost_estimate=cost,
    )(fc, label)

    # Tiny O(C) wrapper-side combine of the per-core partial sums.
    parts = parts.reshape(ncores, _ACC_ROWS, C).sum(axis=0)
    stp, sfp, sfn = parts[0], parts[1], parts[2]
    denom = jnp.float32(B * C)
    focal = jnp.sum(parts[3]) / denom
    acc = jnp.sum(parts[4]) / denom
    soft_f1 = 2.0 * stp / (2.0 * stp + sfp + sfn + F1_EPS)
    f1_loss = 1.0 - jnp.mean(soft_f1)
    return focal, acc, f1_loss, pred_i8, lab_i8


# ----------------------------------------------------------------------------
# Loss_v5 forward
# ----------------------------------------------------------------------------
def loss_v5_forward(results, batch, epoch, config, tile_b=None):
    # No wrapper-side f32 casts: feed the original (possibly bf16) tensors.
    fc = results['fc']
    label = batch['label']

    focal, acc, f1_loss, pred_i8, lab_i8 = _loss_v5_stats(fc, label, tile_b)

    loss_dict = {}
    loss_dict['focal'] = focal
    loss_dict['f1_score_label'] = lab_i8.astype(jnp.bool_)   # cheap 1-byte view
    loss_dict['f1_score_pred'] = pred_i8.astype(jnp.bool_)
    loss_dict['acc'] = acc

    # NOTE: epoch / stage_epoch must be static Python values (as in the torch
    # module). If epoch ever becomes a traced value, switch to lax.cond.
    if epoch >= config['loss']['stage_epoch'][1]:
        loss_dict['f1_loss'] = f1_loss
        loss_dict['total'] = 0.5 * focal + 0.5 * f1_loss
    else:
        loss_dict['total'] = focal
    return loss_dict


# ----------------------------------------------------------------------------
# Pure-JAX references (correctness checks)
# ----------------------------------------------------------------------------
def _ref_focal(fc, label):
    p = jax.nn.sigmoid(fc)
    bce = jnp.maximum(fc, 0.0) - fc * label + jnp.log1p(jnp.exp(-jnp.abs(fc)))
    pt = p * label + (1.0 - p) * (1.0 - label)
    return jnp.mean(((1.0 - pt) ** 2) * bce)


def _ref_f1_loss(label, probs):
    tp = jnp.sum(label * probs, axis=0)
    fp = jnp.sum((1.0 - label) * probs, axis=0)
    fn = jnp.sum(label * (1.0 - probs), axis=0)
    f1 = 2.0 * tp / (2.0 * tp + fp + fn + F1_EPS)
    return 1.0 - jnp.mean(f1)


if __name__ == "__main__":
    key = jax.random.PRNGKey(0)
    k1, k2 = jax.random.split(key, 2)

    # Small but non-trivial shapes: ragged batch (100 % 32 != 0) exercises the
    # row mask, the multi-tile accumulation and the 2-way core split.
    B, C = 100, 16
    fc = jax.random.normal(k1, (B, C), dtype=jnp.float32).astype(jnp.bfloat16)
    label = (jax.random.uniform(k2, (B, C)) > 0.5).astype(jnp.bfloat16)

    results = {'fc': fc}
    batch = {'label': label}
    config = {'loss': {'stage_epoch': [0, 5]}}

    # --- second stage (epoch >= stage_epoch[1]): focal + soft F1 -------------
    out2 = loss_v5_forward(results, batch, epoch=6, config=config, tile_b=32)
    jax.block_until_ready(out2)

    fc32 = fc.astype(jnp.float32)
    lab32 = label.astype(jnp.float32)
    focal_ref = _ref_focal(fc32, lab32)
    f1_ref = _ref_f1_loss(lab32, jax.nn.sigmoid(fc32))
    acc_ref = jnp.mean(((fc32 > 0.0) == (lab32 > 0.5)).astype(jnp.float32))

    np.testing.assert_allclose(np.asarray(out2['focal']), np.asarray(focal_ref),
                               rtol=1e-5, atol=1e-5)
    np.testing.assert_allclose(np.asarray(out2['f1_loss']), np.asarray(f1_ref),
                               rtol=1e-5, atol=1e-5)
    np.testing.assert_allclose(np.asarray(out2['acc']), np.asarray(acc_ref),
                               rtol=1e-6, atol=1e-6)
    np.testing.assert_allclose(
        np.asarray(out2['total']),
        np.asarray(0.5 * focal_ref + 0.5 * f1_ref),
        rtol=1e-5, atol=1e-5)
    np.testing.assert_array_equal(np.asarray(out2['f1_score_pred']),
                                  np.asarray(fc32 > 0.0))
    np.testing.assert_array_equal(np.asarray(out2['f1_score_label']),
                                  np.asarray(lab32 > 0.5))

    # --- first stage (epoch < stage_epoch[1]): focal only, default tiling ----
    out1 = loss_v5_forward(results, batch, epoch=0, config=config)
    jax.block_until_ready(out1)
    np.testing.assert_allclose(np.asarray(out1['total']),
                               np.asarray(focal_ref), rtol=1e-5, atol=1e-5)
    np.testing.assert_array_equal(np.asarray(out1['f1_score_pred']),
                                  np.asarray(fc32 > 0.0))
    assert 'f1_loss' not in out1

    print("KERNEL_OK")
</pallas_src>

<mosaic_0001>
module attributes {stable_mosaic.version = 11 : i64} {
  func.func @_loss_v5_kernel(%arg0: i32, %arg1: i32, %arg2: memref<32x16xbf16, #tpu.memory_space<vmem>>, %arg3: memref<32x16xbf16, #tpu.memory_space<vmem>>, %arg4: memref<32x16xi8, #tpu.memory_space<vmem>>, %arg5: memref<32x16xi8, #tpu.memory_space<vmem>>, %arg6: memref<8x16xf32, #tpu.memory_space<vmem>>, %arg7: memref<1x16xf32, #tpu.memory_space<vmem>>, %arg8: memref<1x16xf32, #tpu.memory_space<vmem>>, %arg9: memref<1x16xf32, #tpu.memory_space<vmem>>, %arg10: memref<1x16xf32, #tpu.memory_space<vmem>>, %arg11: memref<1x16xf32, #tpu.memory_space<vmem>>) attributes {dimension_semantics = [#tpu.dimension_semantics<parallel>, #tpu.dimension_semantics<arbitrary>], iteration_bounds = array<i64: 2, 2>, scalar_prefetch = 0 : i64, scratch_operands = 5 : i64, tpu.core_type = #tpu.core_type<tc>, window_params = [{transform_indices = @transform_0, window_bounds = array<i64: 32, 16>}, {transform_indices = @transform_1, window_bounds = array<i64: 32, 16>}, {transform_indices = @transform_2, window_bounds = array<i64: 32, 16>}, {transform_indices = @transform_3, window_bounds = array<i64: 32, 16>}, {transform_indices = @transform_4, window_bounds = array<i64: 8, 16>}]} {
    %c0 = arith.constant 0 : index
    %c0_0 = arith.constant 0 : index
    %0 = vector.load %arg2[%c0, %c0_0] : memref<32x16xbf16, #tpu.memory_space<vmem>>, vector<32x16xbf16>
    %1 = arith.extf %0 : vector<32x16xbf16> to vector<32x16xf32>
    %c0_1 = arith.constant 0 : index
    %c0_2 = arith.constant 0 : index
    %2 = vector.load %arg3[%c0_1, %c0_2] : memref<32x16xbf16, #tpu.memory_space<vmem>>, vector<32x16xbf16>
    %3 = arith.extf %2 : vector<32x16xbf16> to vector<32x16xf32>
    %cst = arith.constant 0.000000e+00 : f32
    %4 = vector.broadcast %cst : f32 to vector<32x16xf32>
    %5 = arith.cmpf ogt, %1, %4 : vector<32x16xf32>
    %cst_3 = arith.constant 5.000000e-01 : f32
    %6 = vector.broadcast %cst_3 : f32 to vector<32x16xf32>
    %7 = arith.cmpf ogt, %3, %6 : vector<32x16xf32>
    %8 = arith.extui %5 : vector<32x16xi1> to vector<32x16xi8>
    %c0_4 = arith.constant 0 : index
    %c0_5 = arith.constant 0 : index
    %9 = vector.load %arg4[%c0_4, %c0_5] : memref<32x16xi8, #tpu.memory_space<vmem>>, vector<32x16xi8>
    tpu.vector_store %arg4[%c0_4, %c0_5], %8 {strides = array<i32>} : memref<32x16xi8, #tpu.memory_space<vmem>>, vector<32x16xi8>,
    %10 = arith.extui %7 : vector<32x16xi1> to vector<32x16xi8>
    %c0_6 = arith.constant 0 : index
    %c0_7 = arith.constant 0 : index
    %11 = vector.load %arg5[%c0_6, %c0_7] : memref<32x16xi8, #tpu.memory_space<vmem>>, vector<32x16xi8>
    tpu.vector_store %arg5[%c0_6, %c0_7], %10 {strides = array<i32>} : memref<32x16xi8, #tpu.memory_space<vmem>>, vector<32x16xi8>,
    %c2_i32 = arith.constant 2 : i32
    %12 = arith.muli %arg0, %c2_i32 : i32
    %13 = arith.addi %12, %arg1 : i32
    %14 = tpu.iota {dimensions = array<i32: 0>} : vector<32x16xi32>
    %c32_i32 = arith.constant 32 : i32
    %15 = arith.muli %13, %c32_i32 : i32
    %16 = vector.broadcast %15 : i32 to vector<32x16xi32>
    %17 = arith.addi %14, %16 : vector<32x16xi32>
    %c100_i32 = arith.constant 100 : i32
    %18 = vector.broadcast %c100_i32 : i32 to vector<32x16xi32>
    %19 = arith.cmpi slt, %17, %18 : vector<32x16xi32>
    %20 = math.absf %1 : vector<32x16xf32>
    %cst_8 = arith.constant 0.000000e+00 : f32
    %21 = vector.broadcast %cst_8 : f32 to vector<32x16xf32>
    %22 = arith.subf %21, %20 : vector<32x16xf32>
    %23 = math.exp %22 : vector<32x16xf32>
    %cst_9 = arith.constant 1.000000e+00 : f32
    %24 = vector.broadcast %cst_9 : f32 to vector<32x16xf32>
    %25 = arith.addf %24, %23 : vector<32x16xf32>
    %cst_10 = arith.constant 1.000000e+00 : f32
    %26 = vector.broadcast %cst_10 : f32 to vector<32x16xf32>
    %27 = arith.divf %26, %25 : vector<32x16xf32>
    %cst_11 = arith.constant 0.000000e+00 : f32
    %28 = vector.broadcast %cst_11 : f32 to vector<32x16xf32>
    %29 = arith.cmpf oge, %1, %28 : vector<32x16xf32>
    %cst_12 = arith.constant 1.000000e+00 : f32
    %30 = vector.broadcast %cst_12 : f32 to vector<32x16xf32>
    %31 = arith.subf %30, %27 : vector<32x16xf32>
    %32 = arith.select %29, %27, %31 : vector<32x16xi1>, vector<32x16xf32>
    %33 = arith.mulf %32, %3 : vector<32x16xf32>
    %cst_13 = arith.constant 0.000000e+00 : f32
    %34 = vector.broadcast %cst_13 : f32 to vector<32x16xf32>
    %35 = arith.maximumf %1, %34 : vector<32x16xf32>
    %36 = arith.mulf %1, %3 : vector<32x16xf32>
    %37 = arith.subf %35, %36 : vector<32x16xf32>
    %38 = math.log1p %23 : vector<32x16xf32>
    %39 = arith.addf %37, %38 : vector<32x16xf32>
    %40 = arith.addf %32, %3 : vector<32x16xf32>
    %cst_14 = arith.constant 2.000000e+00 : f32
    %41 = vector.broadcast %cst_14 : f32 to vector<32x16xf32>
    %42 = arith.mulf %41, %33 : vector<32x16xf32>
    %43 = arith.subf %40, %42 : vector<32x16xf32>
    %44 = arith.mulf %43, %43 : vector<32x16xf32>
    %45 = arith.mulf %44, %39 : vector<32x16xf32>
    %cst_15 = arith.constant 0.000000e+00 : f32
    %46 = vector.broadcast %cst_15 : f32 to vector<32x16xf32>
    %47 = arith.select %19, %33, %46 : vector<32x16xi1>, vector<32x16xf32>
    %48 = arith.subf %32, %33 : vector<32x16xf32>
    %49 = arith.select %19, %48, %46 : vector<32x16xi1>, vector<32x16xf32>
    %50 = arith.subf %3, %33 : vector<32x16xf32>
    %51 = arith.select %19, %50, %46 : vector<32x16xi1>, vector<32x16xf32>
    %52 = arith.select %19, %45, %46 : vector<32x16xi1>, vector<32x16xf32>
    %53 = arith.xori %5, %7 : vector<32x16xi1>
    %cst_16 = arith.constant dense<true> : vector<32x16xi1>
    %54 = arith.xori %53, %cst_16 : vector<32x16xi1>
    %55 = arith.andi %19, %54 : vector<32x16xi1>
    %cst_17 = arith.constant 1.000000e+00 : f32
    %cst_18 = arith.constant 0.000000e+00 : f32
    %56 = vector.broadcast %cst_17 : f32 to vector<32x16xf32>
    %57 = vector.broadcast %cst_18 : f32 to vector<32x16xf32>
    %58 = arith.select %55, %56, %57 : vector<32x16xi1>, vector<32x16xf32>
    %c0_i32 = arith.constant 0 : i32
    %59 = arith.cmpi eq, %arg1, %c0_i32 : i32
    %60 = arith.extui %59 : i1 to i32
    %c0_i32_19 = arith.constant 0 : i32
    %61 = arith.cmpi ne, %60, %c0_i32_19 : i32
    scf.if %61 {
      %cst_46 = arith.constant 0.000000e+00 : f32
      %90 = vector.broadcast %cst_46 : f32 to vector<1x16xf32>
      %c0_47 = arith.constant 0 : index
      %c0_48 = arith.constant 0 : index
      %91 = vector.load %arg7[%c0_47, %c0_48] : memref<1x16xf32, #tpu.memory_space<vmem>>, vector<1x16xf32>
      tpu.vector_store %arg7[%c0_47, %c0_48], %90 {strides = array<i32>} : memref<1x16xf32, #tpu.memory_space<vmem>>, vector<1x16xf32>,
      %cst_49 = arith.constant 0.000000e+00 : f32
      %92 = vector.broadcast %cst_49 : f32 to vector<1x16xf32>
      %c0_50 = arith.constant 0 : index
      %c0_51 = arith.constant 0 : index
      %93 = vector.load %arg8[%c0_50, %c0_51] : memref<1x16xf32, #tpu.memory_space<vmem>>, vector<1x16xf32>
      tpu.vector_store %arg8[%c0_50, %c0_51], %92 {strides = array<i32>} : memref<1x16xf32, #tpu.memory_space<vmem>>, vector<1x16xf32>,
      %cst_52 = arith.constant 0.000000e+00 : f32
      %94 = vector.broadcast %cst_52 : f32 to vector<1x16xf32>
      %c0_53 = arith.constant 0 : index
      %c0_54 = arith.constant 0 : index
      %95 = vector.load %arg9[%c0_53, %c0_54] : memref<1x16xf32, #tpu.memory_space<vmem>>, vector<1x16xf32>
      tpu.vector_store %arg9[%c0_53, %c0_54], %94 {strides = array<i32>} : memref<1x16xf32, #tpu.memory_space<vmem>>, vector<1x16xf32>,
      %cst_55 = arith.constant 0.000000e+00 : f32
      %96 = vector.broadcast %cst_55 : f32 to vector<1x16xf32>
      %c0_56 = arith.constant 0 : index
      %c0_57 = arith.constant 0 : index
      %97 = vector.load %arg10[%c0_56, %c0_57] : memref<1x16xf32, #tpu.memory_space<vmem>>, vector<1x16xf32>
      tpu.vector_store %arg10[%c0_56, %c0_57], %96 {strides = array<i32>} : memref<1x16xf32, #tpu.memory_space<vmem>>, vector<1x16xf32>,
      %cst_58 = arith.constant 0.000000e+00 : f32
      %98 = vector.broadcast %cst_58 : f32 to vector<1x16xf32>
      %c0_59 = arith.constant 0 : index
      %c0_60 = arith.constant 0 : index
      %99 = vector.load %arg11[%c0_59, %c0_60] : memref<1x16xf32, #tpu.memory_space<vmem>>, vector<1x16xf32>
      tpu.vector_store %arg11[%c0_59, %c0_60], %98 {strides = array<i32>} : memref<1x16xf32, #tpu.memory_space<vmem>>, vector<1x16xf32>,
    } else {
    }
    %c0_20 = arith.constant 0 : index
    %c0_21 = arith.constant 0 : index
    %62 = vector.load %arg7[%c0_20, %c0_21] : memref<1x16xf32, #tpu.memory_space<vmem>>, vector<1x16xf32>
    %cst_22 = arith.constant dense<0.000000e+00> : vector<16xf32>
    %63 = vector.multi_reduction <add>, %47, %cst_22 [0] : vector<32x16xf32> to vector<16xf32>
    %64 = vector.shape_cast %63 : vector<16xf32> to vector<1x16xf32>
    %65 = arith.addf %62, %64 : vector<1x16xf32>
    %c0_23 = arith.constant 0 : index
    %c0_24 = arith.constant 0 : index
    %66 = vector.load %arg7[%c0_23, %c0_24] : memref<1x16xf32, #tpu.memory_space<vmem>>, vector<1x16xf32>
    tpu.vector_store %arg7[%c0_23, %c0_24], %65 {strides = array<i32>} : memref<1x16xf32, #tpu.memory_space<vmem>>, vector<1x16xf32>,
    %c0_25 = arith.constant 0 : index
    %c0_26 = arith.constant 0 : index
    %67 = vector.load %arg8[%c0_25, %c0_26] : memref<1x16xf32, #tpu.memory_space<vmem>>, vector<1x16xf32>
    %cst_27 = arith.constant dense<0.000000e+00> : vector<16xf32>
    %68 = vector.multi_reduction <add>, %49, %cst_27 [0] : vector<32x16xf32> to vector<16xf32>
    %69 = vector.shape_cast %68 : vector<16xf32> to vector<1x16xf32>
    %70 = arith.addf %67, %69 : vector<1x16xf32>
    %c0_28 = arith.constant 0 : index
    %c0_29 = arith.constant 0 : index
    %71 = vector.load %arg8[%c0_28, %c0_29] : memref<1x16xf32, #tpu.memory_space<vmem>>, vector<1x16xf32>
    tpu.vector_store %arg8[%c0_28, %c0_29], %70 {strides = array<i32>} : memref<1x16xf32, #tpu.memory_space<vmem>>, vector<1x16xf32>,
    %c0_30 = arith.constant 0 : index
    %c0_31 = arith.constant 0 : index
    %72 = vector.load %arg9[%c0_30, %c0_31] : memref<1x16xf32, #tpu.memory_space<vmem>>, vector<1x16xf32>
    %cst_32 = arith.constant dense<0.000000e+00> : vector<16xf32>
    %73 = vector.multi_reduction <add>, %51, %cst_32 [0] : vector<32x16xf32> to vector<16xf32>
    %74 = vector.shape_cast %73 : vector<16xf32> to vector<1x16xf32>
    %75 = arith.addf %72, %74 : vector<1x16xf32>
    %c0_33 = arith.constant 0 : index
    %c0_34 = arith.constant 0 : index
    %76 = vector.load %arg9[%c0_33, %c0_34] : memref<1x16xf32, #tpu.memory_space<vmem>>, vector<1x16xf32>
    tpu.vector_store %arg9[%c0_33, %c0_34], %75 {strides = array<i32>} : memref<1x16xf32, #tpu.memory_space<vmem>>, vector<1x16xf32>,
    %c0_35 = arith.constant 0 : index
    %c0_36 = arith.constant 0 : index
    %77 = vector.load %arg10[%c0_35, %c0_36] : memref<1x16xf32, #tpu.memory_space<vmem>>, vector<1x16xf32>
    %cst_37 = arith.constant dense<0.000000e+00> : vector<16xf32>
    %78 = vector.multi_reduction <add>, %52, %cst_37 [0] : vector<32x16xf32> to vector<16xf32>
    %79 = vector.shape_cast %78 : vector<16xf32> to vector<1x16xf32>
    %80 = arith.addf %77, %79 : vector<1x16xf32>
    %c0_38 = arith.constant 0 : index
    %c0_39 = arith.constant 0 : index
    %81 = vector.load %arg10[%c0_38, %c0_39] : memref<1x16xf32, #tpu.memory_space<vmem>>, vector<1x16xf32>
    tpu.vector_store %arg10[%c0_38, %c0_39], %80 {strides = array<i32>} : memref<1x16xf32, #tpu.memory_space<vmem>>, vector<1x16xf32>,
    %c0_40 = arith.constant 0 : index
    %c0_41 = arith.constant 0 : index
    %82 = vector.load %arg11[%c0_40, %c0_41] : memref<1x16xf32, #tpu.memory_space<vmem>>, vector<1x16xf32>
    %cst_42 = arith.constant dense<0.000000e+00> : vector<16xf32>
    %83 = vector.multi_reduction <add>, %58, %cst_42 [0] : vector<32x16xf32> to vector<16xf32>
    %84 = vector.shape_cast %83 : vector<16xf32> to vector<1x16xf32>
    %85 = arith.addf %82, %84 : vector<1x16xf32>
    %c0_43 = arith.constant 0 : index
    %c0_44 = arith.constant 0 : index
    %86 = vector.load %arg11[%c0_43, %c0_44] : memref<1x16xf32, #tpu.memory_space<vmem>>, vector<1x16xf32>
    tpu.vector_store %arg11[%c0_43, %c0_44], %85 {strides = array<i32>} : memref<1x16xf32, #tpu.memory_space<vmem>>, vector<1x16xf32>,
    %c1_i32 = arith.constant 1 : i32
    %87 = arith.cmpi eq, %arg1, %c1_i32 : i32
    %88 = arith.extui %87 : i1 to i32
    %c0_i32_45 = arith.constant 0 : i32
    %89 = arith.cmpi ne, %88, %c0_i32_45 : i32
    scf.if %89 {
      %c0_46 = arith.constant 0 : index
      %c0_47 = arith.constant 0 : index
      %90 = vector.load %arg7[%c0_46, %c0_47] : memref<1x16xf32, #tpu.memory_space<vmem>>, vector<1x16xf32>
      %c0_48 = arith.constant 0 : index
      %c0_49 = arith.constant 0 : index
      %91 = vector.load %arg8[%c0_48, %c0_49] : memref<1x16xf32, #tpu.memory_space<vmem>>, vector<1x16xf32>
      %c0_50 = arith.constant 0 : index
      %c0_51 = arith.constant 0 : index
      %92 = vector.load %arg9[%c0_50, %c0_51] : memref<1x16xf32, #tpu.memory_space<vmem>>, vector<1x16xf32>
      %c0_52 = arith.constant 0 : index
      %c0_53 = arith.constant 0 : index
      %93 = vector.load %arg10[%c0_52, %c0_53] : memref<1x16xf32, #tpu.memory_space<vmem>>, vector<1x16xf32>
      %c0_54 = arith.constant 0 : index
      %c0_55 = arith.constant 0 : index
      %94 = vector.load %arg11[%c0_54, %c0_55] : memref<1x16xf32, #tpu.memory_space<vmem>>, vector<1x16xf32>
      %cst_56 = arith.constant 0.000000e+00 : f32
      %95 = vector.broadcast %cst_56 : f32 to vector<3x16xf32>
      %96 = tpu.concatenate %90, %91, %92, %93, %94, %95 in 0 : vector<1x16xf32>, vector<1x16xf32>, vector<1x16xf32>, vector<1x16xf32>, vector<1x16xf32>, vector<3x16xf32> -> vector<8x16xf32>
      %c0_57 = arith.constant 0 : index
      %c0_58 = arith.constant 0 : index
      %97 = vector.load %arg6[%c0_57, %c0_58] : memref<8x16xf32, #tpu.memory_space<vmem>>, vector<8x16xf32>
      tpu.vector_store %arg6[%c0_57, %c0_58], %96 {strides = array<i32>} : memref<8x16xf32, #tpu.memory_space<vmem>>, vector<8x16xf32>,
    } else {
    }
    return
  }
  func.func @transform_0(%arg0: i32, %arg1: i32) -> (i32, i32) {
    %c2_i32 = arith.constant 2 : i32
    %0 = arith.muli %arg0, %c2_i32 : i32
    %1 = arith.addi %0, %arg1 : i32
    %c0_i32 = arith.constant 0 : i32
    %c0_i32_0 = arith.constant 0 : i32
    return %1, %c0_i32 : i32, i32
  }
  func.func @transform_1(%arg0: i32, %arg1: i32) -> (i32, i32) {
    %c2_i32 = arith.constant 2 : i32
    %0 = arith.muli %arg0, %c2_i32 : i32
    %1 = arith.addi %0, %arg1 : i32
    %c0_i32 = arith.constant 0 : i32
    %c0_i32_0 = arith.constant 0 : i32
    return %1, %c0_i32 : i32, i32
  }
  func.func @transform_2(%arg0: i32, %arg1: i32) -> (i32, i32) {
    %c2_i32 = arith.constant 2 : i32
    %0 = arith.muli %arg0, %c2_i32 : i32
    %1 = arith.addi %0, %arg1 : i32
    %c0_i32 = arith.constant 0 : i32
    %c0_i32_0 = arith.constant 0 : i32
    return %1, %c0_i32 : i32, i32
  }
  func.func @transform_3(%arg0: i32, %arg1: i32) -> (i32, i32) {
    %c2_i32 = arith.constant 2 : i32
    %0 = arith.muli %arg0, %c2_i32 : i32
    %1 = arith.addi %0, %arg1 : i32
    %c0_i32 = arith.constant 0 : i32
    %c0_i32_0 = arith.constant 0 : i32
    return %1, %c0_i32 : i32, i32
  }
  func.func @transform_4(%arg0: i32, %arg1: i32) -> (i32, i32) {
    %c0_i32 = arith.constant 0 : i32
    %c0_i32_0 = arith.constant 0 : i32
    return %arg0, %c0_i32 : i32, i32
  }
}

</mosaic_0001>

<llo_original>
// kernel: tpu_custom_call.1
$region0: #{tpu_custom_call.1}
  #allocation0 [shape = 'u32[]', space=smem, size = 0x4, offset = 0x4, fixed_abs, tag = 'smem constant byte address 0x4 - core index']
  #allocation1 [shape = 'u32[144,128]{1,0:T(1,128)}', space=vmem, size = 0x12000, scoped, tag = 'internal scratch']
  #allocation2 [shape = 'f32[1,16]{1,0:T(1,128)}', space=vmem, size = 0x200, scoped, tag = 'scratch operand']
  #allocation3 [shape = 'f32[1,16]{1,0:T(1,128)}', space=vmem, size = 0x200, scoped, tag = 'scratch operand']
  #allocation4 [shape = 'f32[1,16]{1,0:T(1,128)}', space=vmem, size = 0x200, scoped, tag = 'scratch operand']
  #allocation5 [shape = 'f32[1,16]{1,0:T(1,128)}', space=vmem, size = 0x200, scoped, tag = 'scratch operand']
  #allocation6 [shape = 'f32[1,16]{1,0:T(1,128)}', space=vmem, size = 0x200, scoped, tag = 'scratch operand']
  %s0 = inlined_call_operand.vmem [shape: bf16[100,16], index: 0, kind: input, shape index: {}]
  %s1 = inlined_call_operand.vmem [shape: bf16[100,16], index: 1, kind: input, shape index: {}]
  %s2 = inlined_call_operand.vmem [shape: s8[100,16], index: 2, kind: output, shape index: {0}]
  %s3 = inlined_call_operand.vmem [shape: s8[100,16], index: 3, kind: output, shape index: {1}]
  %s4 = inlined_call_operand.hbm [shape: f32[16,16], index: 4, kind: output, shape index: {2}]
  %5 = xla_tuple %s2, %s3, %s4
  %s6 = sld [smem:[#allocation0]]
  $region153: #{tpu_custom_call.1} parent=0
    _
  %s8 = ssub.s32 1, %s6
  %s9 = scalar_select 0, %s8, %s6
  $region1: #{tpu_custom_call.1} parent=0
    #allocation7 [shape = 'u8[8192]{0}', space=vmem, size = 0x2000, scoped, tag = 'output window, operand 0']
    #allocation8 [shape = 'u8[8192]{0}', space=vmem, size = 0x2000, scoped, tag = 'output window, operand 1']
    #allocation9 [shape = 'u8[8192]{0}', space=vmem, size = 0x2000, scoped, tag = 'output window, operand 2']
    #allocation10 [shape = 's32[2]{0}', space=sflag, size = 0x8, scoped, tag = 'scoped memory for tpu_custom_call.1']
    %10 = vsyncpa [#allocation10], 0
    %s11 = scalar_lea.sflag [#allocation10], 1
    %12 = vsyncpa %s11, 0
    loop: start=0, step=1, limit=6
    $region2: #{tpu_custom_call.1} parent=1 // loop_pre_header
      _
    $region3: #{tpu_custom_call.1} parent=1 // loop_header
      %s14 = sphi 0, %s18
      %p15 = scmp.ge.s32.totalorder %s14, 6
      %s21 = sphi 0, %s33
      %s22 = sphi 0, %s29
      %s23 = sphi 0, %s21
      %s24 = sphi 0, %s22
      %s25 = sphi 0, %s23
      %s26 = sphi 0, %s24
      %s40 = sphi 0, %s42
      %s43 = sphi 0, %s40
      %s44 = sphi 0, %s43
      %s60 = sphi 0, %s44
      %s70 = sphi 0, %s72
      %s73 = sphi 0, %s70
      %s74 = sphi 0, %s73
      %s90 = sphi 0, %s74
      %s100 = sphi 0, %s102
      %s103 = sphi 0, %s100
      %s104 = sphi 0, %s103
      %s120 = sphi 0, %s104
      %s130 = sphi 0, %s132
      %s133 = sphi 0, %s130
      %s134 = sphi 0, %s133
      %s150 = sphi 0, %s134
      %s156 = sphi 0, %s158
      %s159 = sphi 0, %s156
      %s160 = sphi 0, %s159
      %s176 = sphi 0, %s160
    $region4: #{tpu_custom_call.1} parent=1 // loop_header_branch
      %17 = sbr.rel (%p15) target = $region8
    $region5: #{tpu_custom_call.1} parent=1 // loop_body
      %s19 = ssub.s32 %s14, 1
      %s20 = ssub.s32 %s14, 2
      %s27 = sadd.s32 1, %s22
      %p28 = scmp.ge.s32.totalorder %s27, 2
      %s29 = scalar_select %p28, 0, %s27
      %s30 = sadd.s32 1, %s21
      %s31 = scalar_select %p28, %s30, %s21
      %p32 = scmp.ge.s32.totalorder %s31, 2
      %s33 = scalar_select %p32, 0, %s31
      %s34 = smul.u32 %s21, 2
      %s35 = sadd.s32 %s34, %s22
      %s36 = smul.u32 %s33, 2
      %s37 = sadd.s32 %s36, %s29
      %s38 = ssub.s32 %s35, %s37
      %p39 = scmp.eq.s32.totalorder %s38, 0
      %s41 = sadd.s32 %s40, 1
      %s42 = scalar_select %p39, %s40, %s41
      %p45 = pneg %p39
      %p46 = scmp.eq.s32.totalorder %s14, 3
      %p47 = por %p45, %p46
      %p48 = scmp.ne.s32.totalorder %s40, %s43
      %p49 = scmp.eq.s32.totalorder %s14, 0
      %p50 = por %p48, %p49
      %p51 = scmp.ne.s32.totalorder %s40, %s43
      %p52 = scmp.eq.s32.totalorder %s19, 3
      %p53 = por %p51, %p52
      %p54 = scmp.ne.s32.totalorder %s43, %s44
      %p55 = scmp.eq.s32.totalorder %s19, 0
      %p56 = por %p54, %p55
      %p57 = scmp.ne.s32.totalorder %s43, %s44
      %p58 = scmp.eq.s32.totalorder %s20, 3
      %p59 = por %p57, %p58
      %p61 = scmp.ne.s32.totalorder %s44, %s60
      %p62 = scmp.eq.s32.totalorder %s20, 0
      %p63 = por %p61, %p62
      %s64 = smul.u32 %s21, 2
      %s65 = sadd.s32 %s64, %s22
      %s66 = smul.u32 %s33, 2
      %s67 = sadd.s32 %s66, %s29
      %s68 = ssub.s32 %s65, %s67
      %p69 = scmp.eq.s32.totalorder %s68, 0
      %s71 = sadd.s32 %s70, 1
      %s72 = scalar_select %p69, %s70, %s71
      %p75 = pneg %p69
      %p76 = scmp.eq.s32.totalorder %s14, 3
      %p77 = por %p75, %p76
      %p78 = scmp.ne.s32.totalorder %s70, %s73
      %p79 = scmp.eq.s32.totalorder %s14, 0
      %p80 = por %p78, %p79
      %p81 = scmp.ne.s32.totalorder %s70, %s73
      %p82 = scmp.eq.s32.totalorder %s19, 3
      %p83 = por %p81, %p82
      %p84 = scmp.ne.s32.totalorder %s73, %s74
      %p85 = scmp.eq.s32.totalorder %s19, 0
      %p86 = por %p84, %p85
      %p87 = scmp.ne.s32.totalorder %s73, %s74
      %p88 = scmp.eq.s32.totalorder %s20, 3
      %p89 = por %p87, %p88
      %p91 = scmp.ne.s32.totalorder %s74, %s90
      %p92 = scmp.eq.s32.totalorder %s20, 0
      %p93 = por %p91, %p92
      %s94 = smul.u32 %s21, 2
      %s95 = sadd.s32 %s94, %s22
      %s96 = smul.u32 %s33, 2
      %s97 = sadd.s32 %s96, %s29
      %s98 = ssub.s32 %s95, %s97
      %p99 = scmp.eq.s32.totalorder %s98, 0
      %s101 = sadd.s32 %s100, 1
      %s102 = scalar_select %p99, %s100, %s101
      %p105 = pneg %p99
      %p106 = scmp.eq.s32.totalorder %s14, 3
      %p107 = por %p105, %p106
      %p108 = scmp.ne.s32.totalorder %s100, %s103
      %p109 = scmp.eq.s32.totalorder %s14, 0
      %p110 = por %p108, %p109
      %p111 = scmp.ne.s32.totalorder %s100, %s103
      %p112 = scmp.eq.s32.totalorder %s19, 3
      %p113 = por %p111, %p112
      %p114 = scmp.ne.s32.totalorder %s103, %s104
      %p115 = scmp.eq.s32.totalorder %s19, 0
      %p116 = por %p114, %p115
      %p117 = scmp.ne.s32.totalorder %s103, %s104
      %p118 = scmp.eq.s32.totalorder %s20, 3
      %p119 = por %p117, %p118
      %p121 = scmp.ne.s32.totalorder %s104, %s120
      %p122 = scmp.eq.s32.totalorder %s20, 0
      %p123 = por %p121, %p122
      %s124 = smul.u32 %s21, 2
      %s125 = sadd.s32 %s124, %s22
      %s126 = smul.u32 %s33, 2
      %s127 = sadd.s32 %s126, %s29
      %s128 = ssub.s32 %s125, %s127
      %p129 = scmp.eq.s32.totalorder %s128, 0
      %s131 = sadd.s32 %s130, 1
      %s132 = scalar_select %p129, %s130, %s131
      %p135 = pneg %p129
      %p136 = scmp.eq.s32.totalorder %s14, 3
      %p137 = por %p135, %p136
      %p138 = scmp.ne.s32.totalorder %s130, %s133
      %p139 = scmp.eq.s32.totalorder %s14, 0
      %p140 = por %p138, %p139
      %p141 = scmp.ne.s32.totalorder %s130, %s133
      %p142 = scmp.eq.s32.totalorder %s19, 3
      %p143 = por %p141, %p142
      %p144 = scmp.ne.s32.totalorder %s133, %s134
      %p145 = scmp.eq.s32.totalorder %s19, 0
      %p146 = por %p144, %p145
      %p147 = scmp.ne.s32.totalorder %s133, %s134
      %p148 = scmp.eq.s32.totalorder %s20, 3
      %p149 = por %p147, %p148
      %p151 = scmp.ne.s32.totalorder %s134, %s150
      %p152 = scmp.eq.s32.totalorder %s20, 0
      %p153 = por %p151, %p152
      %s154 = ssub.s32 %s21, %s33
      %p155 = scmp.eq.s32.totalorder %s154, 0
      %s157 = sadd.s32 %s156, 1
      %s158 = scalar_select %p155, %s156, %s157
      %p161 = pneg %p155
      %p162 = scmp.eq.s32.totalorder %s14, 3
      %p163 = por %p161, %p162
      %p164 = scmp.ne.s32.totalorder %s156, %s159
      %p165 = scmp.eq.s32.totalorder %s14, 0
      %p166 = por %p164, %p165
      %p167 = scmp.ne.s32.totalorder %s156, %s159
      %p168 = scmp.eq.s32.totalorder %s19, 3
      %p169 = por %p167, %p168
      %p170 = scmp.ne.s32.totalorder %s159, %s160
      %p171 = scmp.eq.s32.totalorder %s19, 0
      %p172 = por %p170, %p171
      %p173 = scmp.ne.s32.totalorder %s159, %s160
      %p174 = scmp.eq.s32.totalorder %s20, 3
      %p175 = por %p173, %p174
      %p177 = scmp.ne.s32.totalorder %s160, %s176
      %p178 = scmp.eq.s32.totalorder %s20, 0
      %p179 = por %p177, %p178
      %p180 = scmp.le.s32.totalorder 1, %s14
      %p181 = scmp.lt.s32.totalorder %s14, 5
      %p182 = pnand %p180, %p181
      %p183 = pneg %p182
      // Predicated region
      $region9: #{tpu_custom_call.1} parent=5 // pred_check
        _
      $region10: #{tpu_custom_call.1} parent=5 // pred_check_branch
        %185 = sbr.rel (%p182) target = $region12
      $region11: #{tpu_custom_call.1} parent=5 // pred_region
        %s186 = ssub.s32 %s14, 1
      $region12: #{tpu_custom_call.1} parent=5 // pred_fallthru
        _
      %p187 = scmp.lt.s32.totalorder %s14, 4
      // Predicated region
      $region13: #{tpu_custom_call.1} parent=5 // pred_check
        %p188 = pneg %p187
      $region14: #{tpu_custom_call.1} parent=5 // pred_check_branch
        %190 = sbr.rel (%p188) target = $region16
      $region15: #{tpu_custom_call.1} parent=5 // pred_region
        // Predicated region
        $region17: #{tpu_custom_call.1} parent=15 // pred_check
          %p191 = pneg %p50
        $region18: #{tpu_custom_call.1} parent=15 // pred_check_branch
          %193 = sbr.rel (%p191) target = $region20
        $region19: #{tpu_custom_call.1} parent=15 // pred_region
          %s194 = smul.u32 %s21, 2
          %s195 = sadd.s32 %s194, %s22
          %s196 = smul.u32 4, %s195
          %s197 = ssub.s32 13, %s196
          %p198 = scmp.lt.s32.totalorder %s197, 4
          %s199 = scalar_select %p198, %s197, 4
          %s200 = smul.u32 64, %s199
          %p201 = scmp.lt.s32.totalorder %s196, 12
          %s202 = scalar_select %p201, %s196, 12
          %s203 = smul.addr %s202, 4
          %s204 = scalar_lea.vmem %s0, %s203
          %s205 = smul.u32 %s21, 2
          %s206 = sadd.s32 %s205, %s22
          %s207 = smul.u32 4, %s206
          %s208 = ssub.s32 13, %s207
          %p209 = scmp.lt.s32.totalorder %s208, 4
          %s210 = scalar_select %p209, %s208, 4
          %s211 = smul.u32 64, %s210
        $region20: #{tpu_custom_call.1} parent=15 // pred_fallthru
          _
        // Predicated region
        $region21: #{tpu_custom_call.1} parent=15 // pred_check
          %p212 = pneg %p80
        $region22: #{tpu_custom_call.1} parent=15 // pred_check_branch
          %214 = sbr.rel (%p212) target = $region24
        $region23: #{tpu_custom_call.1} parent=15 // pred_region
          %s215 = smul.u32 %s21, 2
          %s216 = sadd.s32 %s215, %s22
          %s217 = smul.u32 4, %s216
          %s218 = ssub.s32 13, %s217
          %p219 = scmp.lt.s32.totalorder %s218, 4
          %s220 = scalar_select %p219, %s218, 4
          %s221 = smul.u32 64, %s220
          %p222 = scmp.lt.s32.totalorder %s217, 12
          %s223 = scalar_select %p222, %s217, 12
          %s224 = smul.addr %s223, 4
          %s225 = scalar_lea.vmem %s1, %s224
          %s226 = smul.u32 %s21, 2
          %s227 = sadd.s32 %s226, %s22
          %s228 = smul.u32 4, %s227
          %s229 = ssub.s32 13, %s228
          %p230 = scmp.lt.s32.totalorder %s229, 4
          %s231 = scalar_select %p230, %s229, 4
          %s232 = smul.u32 64, %s231
        $region24: #{tpu_custom_call.1} parent=15 // pred_fallthru
          _
      $region16: #{tpu_custom_call.1} parent=5 // pred_fallthru
        _
      %p233 = scmp.le.s32.totalorder 1, %s14
      %p234 = scmp.lt.s32.totalorder %s14, 5
      %p235 = pnand %p233, %p234
      %p236 = pneg %p235
      // Predicated region
      $region25: #{tpu_custom_call.1} parent=5 // pred_check
        _
      $region26: #{tpu_custom_call.1} parent=5 // pred_check_branch
        %238 = sbr.rel (%p235) target = $region28
      $region27: #{tpu_custom_call.1} parent=5 // pred_region
        %s239 = ssub.s32 %s14, 1
        %s240 = smul.u32 %s23, 2
        %s241 = sadd.s32 %s240, %s24
        %s242 = smul.u32 4, %s241
        %s243 = ssub.s32 13, %s242
        %p244 = scmp.lt.s32.totalorder %s243, 4
        %s245 = scalar_select %p244, %s243, 4
        %s246 = smul.u32 64, %s245
        %p247 = scmp.lt.s32.totalorder %s242, 12
        %s248 = scalar_select %p247, %s242, 12
        %s249 = smul.addr %s248, 4
        %s250 = scalar_lea.vmem %s0, %s249
        %p251 = pneg %p56
        %p252 = pneg %p53
        %s253 = smul.u32 %s23, 2
        %s254 = sadd.s32 %s253, %s24
        %s255 = smul.u32 4, %s254
        %s256 = ssub.s32 13, %s255
        %p257 = scmp.lt.s32.totalorder %s256, 4
        %s258 = scalar_select %p257, %s256, 4
        %s259 = smul.u32 64, %s258
        %p260 = scmp.lt.s32.totalorder %s255, 12
        %s261 = scalar_select %p260, %s255, 12
        %s262 = smul.addr %s261, 4
        %s263 = scalar_lea.vmem %s1, %s262
        %p264 = pneg %p86
        %p265 = pneg %p83
        %p266 = pneg %p116
        %p267 = pneg %p113
        %s268 = sand.u32 %s103, 1
        %s269 = sand.u32 %s103, 1
        %s270 = smul.addr %s269, 8
        %s271 = scalar_lea.vmem [#allocation7], %s270
        %p272 = pneg %p146
        %p273 = pneg %p143
        %s274 = sand.u32 %s133, 1
        %s275 = sand.u32 %s133, 1
        %s276 = smul.addr %s275, 8
        %s277 = scalar_lea.vmem [#allocation8], %s276
        %p278 = pneg %p172
        %p279 = pneg %p169
        %s280 = sand.u32 %s159, 1
        %s281 = scalar_lea.sflag [#allocation10], %s280
        %s282 = sand.u32 %s159, 1
        %s283 = smul.addr %s282, 8
        %s284 = scalar_lea.vmem [#allocation9], %s283
        %s285 = smul.u32 %s23, 2
        %s286 = sadd.s32 %s285, %s24
        %s287 = smul.u32 4, %s286
        %s288 = ssub.s32 13, %s287
        %p289 = scmp.lt.s32.totalorder %s288, 4
        %s290 = scalar_select %p289, %s288, 4
        %s291 = smul.u32 64, %s290
        %p292 = scmp.lt.s32.totalorder %s287, 12
        %s293 = scalar_select %p292, %s287, 12
        %s294 = smul.addr %s293, 4
        %s295 = scalar_lea.vmem %s0, %s294
        %s296 = smul.u32 %s23, 2
        %s297 = sadd.s32 %s296, %s24
        %s298 = smul.u32 4, %s297
        %s299 = ssub.s32 13, %s298
        %p300 = scmp.lt.s32.totalorder %s299, 4
        %s301 = scalar_select %p300, %s299, 4
        %s302 = smul.u32 64, %s301
        %s303 = smul.u32 %s23, 2
        %s304 = sadd.s32 %s303, %s24
        %s305 = smul.u32 4, %s304
        %s306 = ssub.s32 13, %s305
        %p307 = scmp.lt.s32.totalorder %s306, 4
        %s308 = scalar_select %p307, %s306, 4
        %s309 = smul.u32 64, %s308
        %p310 = scmp.lt.s32.totalorder %s305, 12
        %s311 = scalar_select %p310, %s305, 12
        %s312 = smul.addr %s311, 4
        %s313 = scalar_lea.vmem %s1, %s312
        %s314 = smul.u32 %s23, 2
        %s315 = sadd.s32 %s314, %s24
        %s316 = smul.u32 4, %s315
        %s317 = ssub.s32 13, %s316
        %p318 = scmp.lt.s32.totalorder %s317, 4
        %s319 = scalar_select %p318, %s317, 4
        %s320 = smul.u32 64, %s319
        %s321 = smul.u32 %s23, 2
        %s322 = sadd.s32 %s321, %s24
        %s323 = smul.u32 4, %s322
        %s324 = ssub.s32 13, %s323
        %p325 = scmp.lt.s32.totalorder %s324, 4
        %s326 = scalar_select %p325, %s324, 4
        %s327 = smul.u32 32, %s326
        %s328 = smul.u32 %s23, 2
        %s329 = sadd.s32 %s328, %s24
        %s330 = smul.u32 4, %s329
        %s331 = ssub.s32 13, %s330
        %p332 = scmp.lt.s32.totalorder %s331, 4
        %s333 = scalar_select %p332, %s331, 4
        %s334 = smul.u32 32, %s333
        %v337 = vld [vmem:[%s295] sm:$0xf]
        %v338 = vld [vmem:[%s295 + $0x4] sm:$0xf]
        %v339 = vld [vmem:[%s295 + $0x8] sm:$0xf]
        %v340 = vld [vmem:[%s295 + $0xc] sm:$0xf]
        %v341 = vunpack.c.l.bf16 %v337
        %v342 = vunpack.c.l.bf16 %v338
        %v343 = vunpack.c.l.bf16 %v339
        %v344 = vunpack.c.l.bf16 %v340
        %v345 = vld [vmem:[%s313] sm:$0xf]
        %v346 = vld [vmem:[%s313 + $0x4] sm:$0xf]
        %v347 = vld [vmem:[%s313 + $0x8] sm:$0xf]
        %v348 = vld [vmem:[%s313 + $0xc] sm:$0xf]
        %v349 = vunpack.c.l.bf16 %v345
        %v350 = vunpack.c.l.bf16 %v346
        %v351 = vunpack.c.l.bf16 %v347
        %v352 = vunpack.c.l.bf16 %v348
        %vm353 = vcmp.gt.f32.partialorder %v341, 0.0
        %vm354 = vcmp.gt.f32.partialorder %v342, 0.0
        %vm355 = vcmp.gt.f32.partialorder %v343, 0.0
        %vm356 = vcmp.gt.f32.partialorder %v344, 0.0
        %vm357 = vcmp.gt.f32.partialorder %v349, 0.5
        %vm358 = vcmp.gt.f32.partialorder %v350, 0.5
        %vm359 = vcmp.gt.f32.partialorder %v351, 0.5
        %vm360 = vcmp.gt.f32.partialorder %v352, 0.5
        %vm361 = vmpackc.low %vm354, %vm353
        %vm362 = vmpackc.low %vm356, %vm355
        %vm363 = vmpackc.even %vm362, %vm361
        %v364 = vsel %vm363, 16843009, 0
        %v365 = vunpack.c.0.s8 %v364
        %v366 = vunpack.c.1.s8 %v364
        %v367 = vunpack.c.2.s8 %v364
        %v368 = vunpack.c.3.s8 %v364
        %v369 = vpack.c.b16 %v365, %v365
        %v370 = vpack.c.b8 %v369, %v369
        %v371 = vpack.c.b16 %v366, %v366
        %v372 = vpack.c.b8 %v371, %v371
        %v373 = vpack.c.b16 %v367, %v367
        %v374 = vpack.c.b8 %v373, %v373
        %v375 = vpack.c.b16 %v368, %v368
        %v376 = vpack.c.b8 %v375, %v375
        %vm377 = vcmask 123904
        %378 = vst.msk [vmem:[%s271] sm:$0x3] %vm377, %v370
        %379 = vst.msk [vmem:[%s271 + $0x2] sm:$0x3] %vm377, %v372
        %380 = vst.msk [vmem:[%s271 + $0x4] sm:$0x3] %vm377, %v374
        %381 = vst.msk [vmem:[%s271 + $0x6] sm:$0x3] %vm377, %v376
        %vm382 = vmpackc.low %vm358, %vm357
        %vm383 = vmpackc.low %vm360, %vm359
        %vm384 = vmpackc.even %vm383, %vm382
        %v385 = vsel %vm384, 16843009, 0
        %v386 = vunpack.c.0.s8 %v385
        %v387 = vunpack.c.1.s8 %v385
        %v388 = vunpack.c.2.s8 %v385
        %v389 = vunpack.c.3.s8 %v385
        %v390 = vpack.c.b16 %v386, %v386
        %v391 = vpack.c.b8 %v390, %v390
        %v392 = vpack.c.b16 %v387, %v387
        %v393 = vpack.c.b8 %v392, %v392
        %v394 = vpack.c.b16 %v388, %v388
        %v395 = vpack.c.b8 %v394, %v394
        %v396 = vpack.c.b16 %v389, %v389
        %v397 = vpack.c.b8 %v396, %v396
        %398 = vst.msk [vmem:[%s277] sm:$0x3] %vm377, %v391
        %399 = vst.msk [vmem:[%s277 + $0x2] sm:$0x3] %vm377, %v393
        %400 = vst.msk [vmem:[%s277 + $0x4] sm:$0x3] %vm377, %v395
        %401 = vst.msk [vmem:[%s277 + $0x6] sm:$0x3] %vm377, %v397
        %s402 = smul.u32 %s23, 2
        %s403 = sadd.s32 %s402, %s24
        %v404 = vlaneseq
        %v405 = vshrl.u32 %v404, 7
        %v406 = vadd.s32 %v405, 8
        %v407 = vadd.s32 %v405, 16
        %v408 = vadd.s32 %v405, 24
        %s409 = smul.u32 %s403, 32
        %v410 = vstv %s409
        %v411 = vadd.s32 %v405, %v410
        %v412 = vadd.s32 %v406, %v410
        %v413 = vadd.s32 %v407, %v410
        %v414 = vadd.s32 %v408, %v410
        %vm415 = vcmp.lt.s32.totalorder %v411, 100
        %vm416 = vcmp.lt.s32.totalorder %v412, 100
        %vm417 = vcmp.lt.s32.totalorder %v413, 100
        %vm418 = vcmp.lt.s32.totalorder %v414, 100
        %v419 = vand.u32 2147483647, %v341
        %v420 = vand.u32 2147483647, %v342
        %v421 = vand.u32 2147483647, %v343
        %v422 = vand.u32 2147483647, %v344
        %v423 = vsub.f32 0.0, %v419
        %v424 = vsub.f32 0.0, %v420
        %v425 = vsub.f32 0.0, %v421
        %v426 = vsub.f32 0.0, %v422
        %v427 = vmul.f32 %v423, 1.442695
        %v428 = vpow.pop %v427
        %v429 = vmul.f32 %v424, 1.442695
        %v430 = vpow.pop %v429
        %v431 = vmul.f32 %v425, 1.442695
        %v432 = vpow.pop %v431
        %v433 = vmul.f32 %v426, 1.442695
        %v434 = vpow.pop %v433
        %v435 = vadd.f32 %v428, 1.0
        %v436 = vadd.f32 %v430, 1.0
        %v437 = vadd.f32 %v432, 1.0
        %v438 = vadd.f32 %v434, 1.0
        %v439 = vrcp.pop %v435
        %v440 = vmul.f32 1.0, %v439
        %v441 = vrcp.pop %v436
        %v442 = vmul.f32 1.0, %v441
        %v443 = vrcp.pop %v437
        %v444 = vmul.f32 1.0, %v443
        %v445 = vrcp.pop %v438
        %v446 = vmul.f32 1.0, %v445
        %vm447 = vcmp.ge.f32.partialorder %v341, 0.0
        %vm448 = vcmp.ge.f32.partialorder %v342, 0.0
        %vm449 = vcmp.ge.f32.partialorder %v343, 0.0
        %vm450 = vcmp.ge.f32.partialorder %v344, 0.0
        %v451 = vsub.f32 1.0, %v440
        %v452 = vsub.f32 1.0, %v442
        %v453 = vsub.f32 1.0, %v444
        %v454 = vsub.f32 1.0, %v446
        %v455 = vsel %vm447, %v440, %v451
        %v456 = vsel %vm448, %v442, %v452
        %v457 = vsel %vm449, %v444, %v453
        %v458 = vsel %vm450, %v446, %v454
        %v459 = vmul.f32 %v455, %v349
        %v460 = vmul.f32 %v456, %v350
        %v461 = vmul.f32 %v457, %v351
        %v462 = vmul.f32 %v458, %v352
        %v463 = vmax.f32 %v341, 0.0
        %v464 = vmax.f32 %v342, 0.0
        %v465 = vmax.f32 %v343, 0.0
        %v466 = vmax.f32 %v344, 0.0
        %v467 = vmul.f32 %v341, %v349
        %v468 = vmul.f32 %v342, %v350
        %v469 = vmul.f32 %v343, %v351
        %v470 = vmul.f32 %v344, %v352
        %v471 = vsub.f32 %v463, %v467
        %v472 = vsub.f32 %v464, %v468
        %v473 = vsub.f32 %v465, %v469
        %v474 = vsub.f32 %v466, %v470
        %v475 = vadd.f32 %v428, 1.0
        %v476 = vlog2.pop %v475
        %v477 = vmul.f32 %v476, 0.6931472
        %v478 = vmul.f32 -0.5, %v428
        %v479 = vadd.f32 %v478, 1.0
        %v480 = vmul.f32 %v479, %v428
        %v481 = vand.u32 2147483647, %v428
        %vm482 = vcmp.lt.f32.partialorder %v481, 0.0004427343
        %v483 = vsel %vm482, %v480, %v477
        %v484 = vadd.f32 %v430, 1.0
        %v485 = vlog2.pop %v484
        %v486 = vmul.f32 %v485, 0.6931472
        %v487 = vmul.f32 -0.5, %v430
        %v488 = vadd.f32 %v487, 1.0
        %v489 = vmul.f32 %v488, %v430
        %v490 = vand.u32 2147483647, %v430
        %vm491 = vcmp.lt.f32.partialorder %v490, 0.0004427343
        %v492 = vsel %vm491, %v489, %v486
        %v493 = vadd.f32 %v432, 1.0
        %v494 = vlog2.pop %v493
        %v495 = vmul.f32 %v494, 0.6931472
        %v496 = vmul.f32 -0.5, %v432
        %v497 = vadd.f32 %v496, 1.0
        %v498 = vmul.f32 %v497, %v432
        %v499 = vand.u32 2147483647, %v432
        %vm500 = vcmp.lt.f32.partialorder %v499, 0.0004427343
        %v501 = vsel %vm500, %v498, %v495
        %v502 = vadd.f32 %v434, 1.0
        %v503 = vlog2.pop %v502
        %v504 = vmul.f32 %v503, 0.6931472
        %v505 = vmul.f32 -0.5, %v434
        %v506 = vadd.f32 %v505, 1.0
        %v507 = vmul.f32 %v506, %v434
        %v508 = vand.u32 2147483647, %v434
        %vm509 = vcmp.lt.f32.partialorder %v508, 0.0004427343
        %v510 = vsel %vm509, %v507, %v504
        %v511 = vadd.f32 %v471, %v483
        %v512 = vadd.f32 %v472, %v492
        %v513 = vadd.f32 %v473, %v501
        %v514 = vadd.f32 %v474, %v510
        %v515 = vadd.f32 %v455, %v349
        %v516 = vadd.f32 %v456, %v350
        %v517 = vadd.f32 %v457, %v351
        %v518 = vadd.f32 %v458, %v352
        %v519 = vmul.f32 %v459, 2.0
        %v520 = vmul.f32 %v460, 2.0
        %v521 = vmul.f32 %v461, 2.0
        %v522 = vmul.f32 %v462, 2.0
        %v523 = vsub.f32 %v515, %v519
        %v524 = vsub.f32 %v516, %v520
        %v525 = vsub.f32 %v517, %v521
        %v526 = vsub.f32 %v518, %v522
        %v527 = vmul.f32 %v523, %v523
        %v528 = vmul.f32 %v524, %v524
        %v529 = vmul.f32 %v525, %v525
        %v530 = vmul.f32 %v526, %v526
        %v531 = vmul.f32 %v527, %v511
        %v532 = vmul.f32 %v528, %v512
        %v533 = vmul.f32 %v529, %v513
        %v534 = vmul.f32 %v530, %v514
        %v535 = vsel %vm415, %v459, 0.0
        %v536 = vsel %vm416, %v460, 0.0
        %v537 = vsel %vm417, %v461, 0.0
        %v538 = vsel %vm418, %v462, 0.0
        %v539 = vsub.f32 %v455, %v459
        %v540 = vsub.f32 %v456, %v460
        %v541 = vsub.f32 %v457, %v461
        %v542 = vsub.f32 %v458, %v462
        %v543 = vsel %vm415, %v539, 0.0
        %v544 = vsel %vm416, %v540, 0.0
        %v545 = vsel %vm417, %v541, 0.0
        %v546 = vsel %vm418, %v542, 0.0
        %v547 = vsub.f32 %v349, %v459
        %v548 = vsub.f32 %v350, %v460
        %v549 = vsub.f32 %v351, %v461
        %v550 = vsub.f32 %v352, %v462
        %v551 = vsel %vm415, %v547, 0.0
        %v552 = vsel %vm416, %v548, 0.0
        %v553 = vsel %vm417, %v549, 0.0
        %v554 = vsel %vm418, %v550, 0.0
        %v555 = vsel %vm415, %v531, 0.0
        %v556 = vsel %vm416, %v532, 0.0
        %v557 = vsel %vm417, %v533, 0.0
        %v558 = vsel %vm418, %v534, 0.0
        %vm559 = vmxor %vm353, %vm357
        %vm560 = vmxor %vm354, %vm358
        %vm561 = vmxor %vm355, %vm359
        %vm562 = vmxor %vm356, %vm360
        %vm563 = vmxor %vm559, 1
        %vm564 = vmxor %vm560, 1
        %vm565 = vmxor %vm561, 1
        %vm566 = vmxor %vm562, 1
        %vm567 = vmand %vm415, %vm563
        %vm568 = vmand %vm416, %vm564
        %vm569 = vmand %vm417, %vm565
        %vm570 = vmand %vm418, %vm566
        %v571 = vsel %vm567, 1.0, 0.0
        %v572 = vsel %vm568, 1.0, 0.0
        %v573 = vsel %vm569, 1.0, 0.0
        %v574 = vsel %vm570, 1.0, 0.0
        %p575 = scmp.eq.s32.totalorder %s24, 0
        // Predicated region
        $region29: #{tpu_custom_call.1} parent=27 // pred_check
          %p576 = pneg %p575
        $region30: #{tpu_custom_call.1} parent=27 // pred_check_branch
          %578 = sbr.rel (%p576) target = $region32
        $region31: #{tpu_custom_call.1} parent=27 // pred_region
          %vm579 = vcmask 122880
          %580 = vst.msk [vmem:[#allocation2] sm:$0x1] %vm579, 0.0
          %581 = vst.msk [vmem:[#allocation3] sm:$0x1] %vm579, 0.0
          %582 = vst.msk [vmem:[#allocation4] sm:$0x1] %vm579, 0.0
          %583 = vst.msk [vmem:[#allocation5] sm:$0x1] %vm579, 0.0
          %584 = vst.msk [vmem:[#allocation6] sm:$0x1] %vm579, 0.0
        $region32: #{tpu_custom_call.1} parent=27 // pred_fallthru
          _
        %v585 = vld [vmem:[#allocation2] sm:$0x1]
        %vm586 = vcmask 130048
        %v587 = vsel %vm586, %v535, 0.0
        %v588 = vsel %vm586, %v536, 0.0
        %v589 = vadd.f32 %v587, %v588
        %v590 = vsel %vm586, %v537, 0.0
        %v591 = vadd.f32 %v589, %v590
        %v592 = vsel %vm586, %v538, 0.0
        %v593 = vadd.f32 %v591, %v592
        %v594 = vrot.slane %v593, 4
        %v595 = vadd.f32 %v593, %v594
        %v596 = vrot.slane %v595, 2
        %v597 = vadd.f32 %v595, %v596
        %v598 = vrot.slane %v597, 1
        %v599 = vadd.f32 %v597, %v598
        %v600 = vadd.f32 %v585, %v599
        %vm601 = vcmask 122880
        %602 = vst.msk [vmem:[#allocation2] sm:$0x1] %vm601, %v600
        %v603 = vld [vmem:[#allocation3] sm:$0x1]
        %v604 = vsel %vm586, %v543, 0.0
        %v605 = vsel %vm586, %v544, 0.0
        %v606 = vadd.f32 %v604, %v605
        %v607 = vsel %vm586, %v545, 0.0
        %v608 = vadd.f32 %v606, %v607
        %v609 = vsel %vm586, %v546, 0.0
        %v610 = vadd.f32 %v608, %v609
        %v611 = vrot.slane %v610, 4
        %v612 = vadd.f32 %v610, %v611
        %v613 = vrot.slane %v612, 2
        %v614 = vadd.f32 %v612, %v613
        %v615 = vrot.slane %v614, 1
        %v616 = vadd.f32 %v614, %v615
        %v617 = vadd.f32 %v603, %v616
        %618 = vst.msk [vmem:[#allocation3] sm:$0x1] %vm601, %v617
        %v619 = vld [vmem:[#allocation4] sm:$0x1]
        %v620 = vsel %vm586, %v551, 0.0
        %v621 = vsel %vm586, %v552, 0.0
        %v622 = vadd.f32 %v620, %v621
        %v623 = vsel %vm586, %v553, 0.0
        %v624 = vadd.f32 %v622, %v623
        %v625 = vsel %vm586, %v554, 0.0
        %v626 = vadd.f32 %v624, %v625
        %v627 = vrot.slane %v626, 4
        %v628 = vadd.f32 %v626, %v627
        %v629 = vrot.slane %v628, 2
        %v630 = vadd.f32 %v628, %v629
        %v631 = vrot.slane %v630, 1
        %v632 = vadd.f32 %v630, %v631
        %v633 = vadd.f32 %v619, %v632
        %634 = vst.msk [vmem:[#allocation4] sm:$0x1] %vm601, %v633
        %v635 = vld [vmem:[#allocation5] sm:$0x1]
        %v636 = vsel %vm586, %v555, 0.0
        %v637 = vsel %vm586, %v556, 0.0
        %v638 = vadd.f32 %v636, %v637
        %v639 = vsel %vm586, %v557, 0.0
        %v640 = vadd.f32 %v638, %v639
        %v641 = vsel %vm586, %v558, 0.0
        %v642 = vadd.f32 %v640, %v641
        %v643 = vrot.slane %v642, 4
        %v644 = vadd.f32 %v642, %v643
        %v645 = vrot.slane %v644, 2
        %v646 = vadd.f32 %v644, %v645
        %v647 = vrot.slane %v646, 1
        %v648 = vadd.f32 %v646, %v647
        %v649 = vadd.f32 %v635, %v648
        %650 = vst.msk [vmem:[#allocation5] sm:$0x1] %vm601, %v649
        %v651 = vld [vmem:[#allocation6] sm:$0x1]
        %v652 = vsel %vm586, %v571, 0.0
        %v653 = vsel %vm586, %v572, 0.0
        %v654 = vadd.f32 %v652, %v653
        %v655 = vsel %vm586, %v573, 0.0
        %v656 = vadd.f32 %v654, %v655
        %v657 = vsel %vm586, %v574, 0.0
        %v658 = vadd.f32 %v656, %v657
        %v659 = vrot.slane %v658, 4
        %v660 = vadd.f32 %v658, %v659
        %v661 = vrot.slane %v660, 2
        %v662 = vadd.f32 %v660, %v661
        %v663 = vrot.slane %v662, 1
        %v664 = vadd.f32 %v662, %v663
        %v665 = vadd.f32 %v651, %v664
        %666 = vst.msk [vmem:[#allocation6] sm:$0x1] %vm601, %v665
        %p667 = scmp.eq.s32.totalorder %s24, 1
        // Predicated region
        $region33: #{tpu_custom_call.1} parent=27 // pred_check
          %p668 = pneg %p667
        $region34: #{tpu_custom_call.1} parent=27 // pred_check_branch
          %670 = sbr.rel (%p668) target = $region36
        $region35: #{tpu_custom_call.1} parent=27 // pred_region
          %v671 = vld [vmem:[#allocation2] sm:$0x1]
          %v672 = vld [vmem:[#allocation3] sm:$0x1]
          %v673 = vld [vmem:[#allocation4] sm:$0x1]
          %v674 = vld [vmem:[#allocation5] sm:$0x1]
          %v675 = vld [vmem:[#allocation6] sm:$0x1]
          %v677 = vlaneseq
          %v678 = vshrl.u32 %v677, 7
          %v679 = vsub.s32 0, %v678
          %v680 = vrot.slane %v672, %v679
          %v683 = vlaneseq
          %v684 = vshrl.u32 %v683, 7
          %v685 = vsub.s32 0, %v684
          %v686 = vrot.slane %v673, %v685
          %v689 = vlaneseq
          %v690 = vshrl.u32 %v689, 7
          %v691 = vsub.s32 0, %v690
          %v692 = vrot.slane %v674, %v691
          %v695 = vlaneseq
          %v696 = vshrl.u32 %v695, 7
          %v697 = vsub.s32 0, %v696
          %v698 = vrot.slane %v675, %v697
          %vm700 = vcmask 1040384
          %v701 = vsel %vm700, %v671, %v680
          %vm702 = vcmask 1041408
          %v703 = vsel %vm702, %v701, %v686
          %vm704 = vcmask 1042432
          %v705 = vsel %vm704, %v703, %v692
          %vm706 = vcmask 1043456
          %v707 = vsel %vm706, %v705, %v698
          %vm708 = vcmask 1044480
          %v709 = vsel %vm708, %v707, 0.0
          %710 = vst.msk [vmem:[%s284] sm:$0xff] %vm586, %v709
        $region36: #{tpu_custom_call.1} parent=27 // pred_fallthru
          _
        %s711 = sand.u32 %s103, 1
        %s712 = sand.u32 %s103, 1
        %s713 = smul.addr %s712, 8
        %s714 = scalar_lea.vmem [#allocation7], %s713
        %s715 = sand.u32 %s133, 1
        %s716 = sand.u32 %s133, 1
        %s717 = smul.addr %s716, 8
        %s718 = scalar_lea.vmem [#allocation8], %s717
        %s719 = sand.u32 %s159, 1
        %s720 = scalar_lea.sflag [#allocation10], %s719
        %s721 = sand.u32 %s159, 1
        %s722 = smul.addr %s721, 8
        %s723 = scalar_lea.vmem [#allocation9], %s722
        // Predicated region
        $region37: #{tpu_custom_call.1} parent=27 // pred_check
          %p724 = pneg %p113
        $region38: #{tpu_custom_call.1} parent=27 // pred_check_branch
          %726 = sbr.rel (%p724) target = $region40
        $region39: #{tpu_custom_call.1} parent=27 // pred_region
          %s727 = smul.u32 %s23, 2
          %s728 = sadd.s32 %s727, %s24
          %s729 = smul.u32 4, %s728
          %s730 = ssub.s32 13, %s729
          %p731 = scmp.lt.s32.totalorder %s730, 4
          %s732 = scalar_select %p731, %s730, 4
          %s733 = smul.u32 32, %s732
          %p734 = scmp.ne.s32.totalorder 0, %s733
          %s735 = smul.addr %s729, 2
          %s736 = scalar_lea.vmem %s2, %s735
          // Predicated region
          $region41: #{tpu_custom_call.1} parent=39 // pred_check
            %p737 = pneg %p734
          $region42: #{tpu_custom_call.1} parent=39 // pred_check_branch
            %739 = sbr.rel (%p737) target = $region44
          $region43: #{tpu_custom_call.1} parent=39 // pred_region
            // Predicated region
            $region45: #{tpu_custom_call.1} parent=43 // pred_check
              _
            $region46: #{tpu_custom_call.1} parent=43 // pred_check_branch
              %741 = sbr.rel target = $region48
            $region47: #{tpu_custom_call.1} parent=43 // pred_region
              // Predicated region
              $region67: #{tpu_custom_call.1} parent=47 // pred_check
                _
              $region68: #{tpu_custom_call.1} parent=47 // pred_check_branch
                %796 = sbr.rel (0) target = $region70
              $region69: #{tpu_custom_call.1} parent=47 // pred_region
                %s798 = sshrl.u32 %s732, 2
                // While loop
                $region71: #{tpu_custom_call.1} parent=69 // loop_pre_header
                  _
                $region72: #{tpu_custom_call.1} parent=69 // loop_header
                  %s800 = sphi 0, %s802
                  %p801 = scmp.ge.s32.totalorder %s800, %s798
                  %s805 = sphi 0, %s818
                  %s806 = sphi %s714, %s821
                  %s807 = sphi %s736, %s822
                $region73: #{tpu_custom_call.1} parent=69 // loop_header_branch
                  %804 = sbr.rel (%p801) target = $region77
                $region74: #{tpu_custom_call.1} parent=69 // loop_body
                  %v808 = vld [vmem:[%s806] sm:$0x3]
                  %809 = vst [vmem:[%s807] sm:$0x3] %v808
                  %v810 = vld [vmem:[%s806 + $0x2] sm:$0x3]
                  %811 = vst [vmem:[%s807 + $0x2] sm:$0x3] %v810
                  %v812 = vld [vmem:[%s806 + $0x4] sm:$0x3]
                  %813 = vst [vmem:[%s807 + $0x4] sm:$0x3] %v812
                  %v814 = vld [vmem:[%s806 + $0x6] sm:$0x3]
                  %815 = vst [vmem:[%s807 + $0x6] sm:$0x3] %v814
                  %s816 = sadd.s32 1, %s805
                  %p817 = scmp.ge.s32.totalorder %s816, %s798
                  %s818 = scalar_select %p817, 0, %s816
                  %s819 = smul.u32 %s818, 8
                  %s820 = smul.u32 %s818, 8
                  %s821 = scalar_lea.vmem %s714, %s819 [#allocation7]
                  %s822 = scalar_lea.vmem %s736, %s820
                $region75: #{tpu_custom_call.1} parent=69 // loop_footer
                  %s802 = sadd.s32 %s800, 1
                $region76: #{tpu_custom_call.1} parent=69 // loop_footer_branch
                  %799 = sbr.rel target = $region72
                $region77: #{tpu_custom_call.1} parent=69 // loop_exit
                  _
                %s823 = sshrl.u32 %s732, 2
                %s824 = sand.u32 %s732, 3
                %s825 = smul.u32 %s823, 4
                %s826 = smul.u32 2, %s825
                %s827 = scalar_lea.vmem %s714, %s826 [#allocation7]
                %s828 = smul.u32 2, %s825
                %s829 = scalar_lea.vmem %s736, %s828
                // While loop
                $region78: #{tpu_custom_call.1} parent=69 // loop_pre_header
                  _
                $region79: #{tpu_custom_call.1} parent=69 // loop_header
                  %s831 = sphi 0, %s833
                  %p832 = scmp.ge.s32.totalorder %s831, %s824
                  %s836 = sphi 0, %s843
                  %s837 = sphi %s827, %s846
                  %s838 = sphi %s829, %s847
                $region80: #{tpu_custom_call.1} parent=69 // loop_header_branch
                  %835 = sbr.rel (%p832) target = $region84
                $region81: #{tpu_custom_call.1} parent=69 // loop_body
                  %v839 = vld [vmem:[%s837] sm:$0x3]
                  %840 = vst [vmem:[%s838] sm:$0x3] %v839
                  %s841 = sadd.s32 1, %s836
                  %p842 = scmp.ge.s32.totalorder %s841, %s824
                  %s843 = scalar_select %p842, 0, %s841
                  %s844 = smul.u32 %s843, 2
                  %s845 = smul.u32 %s843, 2
                  %s846 = scalar_lea.vmem %s827, %s844 [#allocation7]
                  %s847 = scalar_lea.vmem %s829, %s845
                $region82: #{tpu_custom_call.1} parent=69 // loop_footer
                  %s833 = sadd.s32 %s831, 1
                $region83: #{tpu_custom_call.1} parent=69 // loop_footer_branch
                  %830 = sbr.rel target = $region79
                $region84: #{tpu_custom_call.1} parent=69 // loop_exit
                  _
              $region70: #{tpu_custom_call.1} parent=47 // pred_fallthru
                _
            $region48: #{tpu_custom_call.1} parent=43 // pred_fallthru
              _
            // Predicated region
            $region49: #{tpu_custom_call.1} parent=43 // pred_check
              _
            $region50: #{tpu_custom_call.1} parent=43 // pred_check_branch
              %743 = sbr.rel (0) target = $region52
            $region51: #{tpu_custom_call.1} parent=43 // pred_region
              %s745 = sshrl.u32 %s732, 2
              // While loop
              $region53: #{tpu_custom_call.1} parent=51 // loop_pre_header
                _
              $region54: #{tpu_custom_call.1} parent=51 // loop_header
                %s747 = sphi 0, %s749
                %p748 = scmp.ge.s32.totalorder %s747, %s745
                %s752 = sphi 0, %s765
                %s753 = sphi %s714, %s768
                %s754 = sphi %s736, %s769
              $region55: #{tpu_custom_call.1} parent=51 // loop_header_branch
                %751 = sbr.rel (%p748) target = $region59
              $region56: #{tpu_custom_call.1} parent=51 // loop_body
                %v755 = vld [vmem:[%s753] sm:$0x3]
                %756 = vst [vmem:[%s754] sm:$0x3] %v755
                %v757 = vld [vmem:[%s753 + $0x2] sm:$0x3]
                %758 = vst [vmem:[%s754 + $0x2] sm:$0x3] %v757
                %v759 = vld [vmem:[%s753 + $0x4] sm:$0x3]
                %760 = vst [vmem:[%s754 + $0x4] sm:$0x3] %v759
                %v761 = vld [vmem:[%s753 + $0x6] sm:$0x3]
                %762 = vst [vmem:[%s754 + $0x6] sm:$0x3] %v761
                %s763 = sadd.s32 1, %s752
                %p764 = scmp.ge.s32.totalorder %s763, %s745
                %s765 = scalar_select %p764, 0, %s763
                %s766 = smul.u32 %s765, 8
                %s767 = smul.u32 %s765, 8
                %s768 = scalar_lea.vmem %s714, %s766 [#allocation7]
                %s769 = scalar_lea.vmem %s736, %s767
              $region57: #{tpu_custom_call.1} parent=51 // loop_footer
                %s749 = sadd.s32 %s747, 1
              $region58: #{tpu_custom_call.1} parent=51 // loop_footer_branch
                %746 = sbr.rel target = $region54
              $region59: #{tpu_custom_call.1} parent=51 // loop_exit
                _
              %s770 = sshrl.u32 %s732, 2
              %s771 = sand.u32 %s732, 3
              %s772 = smul.u32 %s770, 4
              %s773 = smul.u32 2, %s772
              %s774 = scalar_lea.vmem %s714, %s773 [#allocation7]
              %s775 = smul.u32 2, %s772
              %s776 = scalar_lea.vmem %s736, %s775
              // While loop
              $region60: #{tpu_custom_call.1} parent=51 // loop_pre_header
                _
              $region61: #{tpu_custom_call.1} parent=51 // loop_header
                %s778 = sphi 0, %s780
                %p779 = scmp.ge.s32.totalorder %s778, %s771
                %s783 = sphi 0, %s790
                %s784 = sphi %s774, %s793
                %s785 = sphi %s776, %s794
              $region62: #{tpu_custom_call.1} parent=51 // loop_header_branch
                %782 = sbr.rel (%p779) target = $region66
              $region63: #{tpu_custom_call.1} parent=51 // loop_body
                %v786 = vld [vmem:[%s784] sm:$0x3]
                %787 = vst [vmem:[%s785] sm:$0x3] %v786
                %s788 = sadd.s32 1, %s783
                %p789 = scmp.ge.s32.totalorder %s788, %s771
                %s790 = scalar_select %p789, 0, %s788
                %s791 = smul.u32 %s790, 2
                %s792 = smul.u32 %s790, 2
                %s793 = scalar_lea.vmem %s774, %s791 [#allocation7]
                %s794 = scalar_lea.vmem %s776, %s792
              $region64: #{tpu_custom_call.1} parent=51 // loop_footer
                %s780 = sadd.s32 %s778, 1
              $region65: #{tpu_custom_call.1} parent=51 // loop_footer_branch
                %777 = sbr.rel target = $region61
              $region66: #{tpu_custom_call.1} parent=51 // loop_exit
                _
            $region52: #{tpu_custom_call.1} parent=43 // pred_fallthru
              _
          $region44: #{tpu_custom_call.1} parent=39 // pred_fallthru
            _
          %848 = vnop
        $region40: #{tpu_custom_call.1} parent=27 // pred_fallthru
          _
        // Predicated region
        $region85: #{tpu_custom_call.1} parent=27 // pred_check
          %p849 = pneg %p143
        $region86: #{tpu_custom_call.1} parent=27 // pred_check_branch
          %851 = sbr.rel (%p849) target = $region88
        $region87: #{tpu_custom_call.1} parent=27 // pred_region
          %s852 = smul.u32 %s23, 2
          %s853 = sadd.s32 %s852, %s24
          %s854 = smul.u32 4, %s853
          %s855 = ssub.s32 13, %s854
          %p856 = scmp.lt.s32.totalorder %s855, 4
          %s857 = scalar_select %p856, %s855, 4
          %s858 = smul.u32 32, %s857
          %p859 = scmp.ne.s32.totalorder 0, %s858
          %s860 = smul.addr %s854, 2
          %s861 = scalar_lea.vmem %s3, %s860
          // Predicated region
          $region89: #{tpu_custom_call.1} parent=87 // pred_check
            %p862 = pneg %p859
          $region90: #{tpu_custom_call.1} parent=87 // pred_check_branch
            %864 = sbr.rel (%p862) target = $region92
          $region91: #{tpu_custom_call.1} parent=87 // pred_region
            // Predicated region
            $region93: #{tpu_custom_call.1} parent=91 // pred_check
              _
            $region94: #{tpu_custom_call.1} parent=91 // pred_check_branch
              %866 = sbr.rel target = $region96
            $region95: #{tpu_custom_call.1} parent=91 // pred_region
              // Predicated region
              $region115: #{tpu_custom_call.1} parent=95 // pred_check
                _
              $region116: #{tpu_custom_call.1} parent=95 // pred_check_branch
                %921 = sbr.rel (0) target = $region118
              $region117: #{tpu_custom_call.1} parent=95 // pred_region
                %s923 = sshrl.u32 %s857, 2
                // While loop
                $region119: #{tpu_custom_call.1} parent=117 // loop_pre_header
                  _
                $region120: #{tpu_custom_call.1} parent=117 // loop_header
                  %s925 = sphi 0, %s927
                  %p926 = scmp.ge.s32.totalorder %s925, %s923
                  %s930 = sphi 0, %s943
                  %s931 = sphi %s718, %s946
                  %s932 = sphi %s861, %s947
                $region121: #{tpu_custom_call.1} parent=117 // loop_header_branch
                  %929 = sbr.rel (%p926) target = $region125
                $region122: #{tpu_custom_call.1} parent=117 // loop_body
                  %v933 = vld [vmem:[%s931] sm:$0x3]
                  %934 = vst [vmem:[%s932] sm:$0x3] %v933
                  %v935 = vld [vmem:[%s931 + $0x2] sm:$0x3]
                  %936 = vst [vmem:[%s932 + $0x2] sm:$0x3] %v935
                  %v937 = vld [vmem:[%s931 + $0x4] sm:$0x3]
                  %938 = vst [vmem:[%s932 + $0x4] sm:$0x3] %v937
                  %v939 = vld [vmem:[%s931 + $0x6] sm:$0x3]
                  %940 = vst [vmem:[%s932 + $0x6] sm:$0x3] %v939
                  %s941 = sadd.s32 1, %s930
                  %p942 = scmp.ge.s32.totalorder %s941, %s923
                  %s943 = scalar_select %p942, 0, %s941
                  %s944 = smul.u32 %s943, 8
                  %s945 = smul.u32 %s943, 8
                  %s946 = scalar_lea.vmem %s718, %s944 [#allocation8]
                  %s947 = scalar_lea.vmem %s861, %s945
                $region123: #{tpu_custom_call.1} parent=117 // loop_footer
                  %s927 = sadd.s32 %s925, 1
                $region124: #{tpu_custom_call.1} parent=117 // loop_footer_branch
                  %924 = sbr.rel target = $region120
                $region125: #{tpu_custom_call.1} parent=117 // loop_exit
                  _
                %s948 = sshrl.u32 %s857, 2
                %s949 = sand.u32 %s857, 3
                %s950 = smul.u32 %s948, 4
                %s951 = smul.u32 2, %s950
                %s952 = scalar_lea.vmem %s718, %s951 [#allocation8]
                %s953 = smul.u32 2, %s950
                %s954 = scalar_lea.vmem %s861, %s953
                // While loop
                $region126: #{tpu_custom_call.1} parent=117 // loop_pre_header
                  _
                $region127: #{tpu_custom_call.1} parent=117 // loop_header
                  %s956 = sphi 0, %s958
                  %p957 = scmp.ge.s32.totalorder %s956, %s949
                  %s961 = sphi 0, %s968
                  %s962 = sphi %s952, %s971
                  %s963 = sphi %s954, %s972
                $region128: #{tpu_custom_call.1} parent=117 // loop_header_branch
                  %960 = sbr.rel (%p957) target = $region132
                $region129: #{tpu_custom_call.1} parent=117 // loop_body
                  %v964 = vld [vmem:[%s962] sm:$0x3]
                  %965 = vst [vmem:[%s963] sm:$0x3] %v964
                  %s966 = sadd.s32 1, %s961
                  %p967 = scmp.ge.s32.totalorder %s966, %s949
                  %s968 = scalar_select %p967, 0, %s966
                  %s969 = smul.u32 %s968, 2
                  %s970 = smul.u32 %s968, 2
                  %s971 = scalar_lea.vmem %s952, %s969 [#allocation8]
                  %s972 = scalar_lea.vmem %s954, %s970
                $region130: #{tpu_custom_call.1} parent=117 // loop_footer
                  %s958 = sadd.s32 %s956, 1
                $region131: #{tpu_custom_call.1} parent=117 // loop_footer_branch
                  %955 = sbr.rel target = $region127
                $region132: #{tpu_custom_call.1} parent=117 // loop_exit
                  _
              $region118: #{tpu_custom_call.1} parent=95 // pred_fallthru
                _
            $region96: #{tpu_custom_call.1} parent=91 // pred_fallthru
              _
            // Predicated region
            $region97: #{tpu_custom_call.1} parent=91 // pred_check
              _
            $region98: #{tpu_custom_call.1} parent=91 // pred_check_branch
              %868 = sbr.rel (0) target = $region100
            $region99: #{tpu_custom_call.1} parent=91 // pred_region
              %s870 = sshrl.u32 %s857, 2
              // While loop
              $region101: #{tpu_custom_call.1} parent=99 // loop_pre_header
                _
              $region102: #{tpu_custom_call.1} parent=99 // loop_header
                %s872 = sphi 0, %s874
                %p873 = scmp.ge.s32.totalorder %s872, %s870
                %s877 = sphi 0, %s890
                %s878 = sphi %s718, %s893
                %s879 = sphi %s861, %s894
              $region103: #{tpu_custom_call.1} parent=99 // loop_header_branch
                %876 = sbr.rel (%p873) target = $region107
              $region104: #{tpu_custom_call.1} parent=99 // loop_body
                %v880 = vld [vmem:[%s878] sm:$0x3]
                %881 = vst [vmem:[%s879] sm:$0x3] %v880
                %v882 = vld [vmem:[%s878 + $0x2] sm:$0x3]
                %883 = vst [vmem:[%s879 + $0x2] sm:$0x3] %v882
                %v884 = vld [vmem:[%s878 + $0x4] sm:$0x3]
                %885 = vst [vmem:[%s879 + $0x4] sm:$0x3] %v884
                %v886 = vld [vmem:[%s878 + $0x6] sm:$0x3]
                %887 = vst [vmem:[%s879 + $0x6] sm:$0x3] %v886
                %s888 = sadd.s32 1, %s877
                %p889 = scmp.ge.s32.totalorder %s888, %s870
                %s890 = scalar_select %p889, 0, %s888
                %s891 = smul.u32 %s890, 8
                %s892 = smul.u32 %s890, 8
                %s893 = scalar_lea.vmem %s718, %s891 [#allocation8]
                %s894 = scalar_lea.vmem %s861, %s892
              $region105: #{tpu_custom_call.1} parent=99 // loop_footer
                %s874 = sadd.s32 %s872, 1
              $region106: #{tpu_custom_call.1} parent=99 // loop_footer_branch
                %871 = sbr.rel target = $region102
              $region107: #{tpu_custom_call.1} parent=99 // loop_exit
                _
              %s895 = sshrl.u32 %s857, 2
              %s896 = sand.u32 %s857, 3
              %s897 = smul.u32 %s895, 4
              %s898 = smul.u32 2, %s897
              %s899 = scalar_lea.vmem %s718, %s898 [#allocation8]
              %s900 = smul.u32 2, %s897
              %s901 = scalar_lea.vmem %s861, %s900
              // While loop
              $region108: #{tpu_custom_call.1} parent=99 // loop_pre_header
                _
              $region109: #{tpu_custom_call.1} parent=99 // loop_header
                %s903 = sphi 0, %s905
                %p904 = scmp.ge.s32.totalorder %s903, %s896
                %s908 = sphi 0, %s915
                %s909 = sphi %s899, %s918
                %s910 = sphi %s901, %s919
              $region110: #{tpu_custom_call.1} parent=99 // loop_header_branch
                %907 = sbr.rel (%p904) target = $region114
              $region111: #{tpu_custom_call.1} parent=99 // loop_body
                %v911 = vld [vmem:[%s909] sm:$0x3]
                %912 = vst [vmem:[%s910] sm:$0x3] %v911
                %s913 = sadd.s32 1, %s908
                %p914 = scmp.ge.s32.totalorder %s913, %s896
                %s915 = scalar_select %p914, 0, %s913
                %s916 = smul.u32 %s915, 2
                %s917 = smul.u32 %s915, 2
                %s918 = scalar_lea.vmem %s899, %s916 [#allocation8]
                %s919 = scalar_lea.vmem %s901, %s917
              $region112: #{tpu_custom_call.1} parent=99 // loop_footer
                %s905 = sadd.s32 %s903, 1
              $region113: #{tpu_custom_call.1} parent=99 // loop_footer_branch
                %902 = sbr.rel target = $region109
              $region114: #{tpu_custom_call.1} parent=99 // loop_exit
                _
            $region100: #{tpu_custom_call.1} parent=91 // pred_fallthru
              _
          $region92: #{tpu_custom_call.1} parent=87 // pred_fallthru
            _
          %973 = vnop
        $region88: #{tpu_custom_call.1} parent=27 // pred_fallthru
          _
        // Predicated region
        $region133: #{tpu_custom_call.1} parent=27 // pred_check
          %p974 = pneg %p169
        $region134: #{tpu_custom_call.1} parent=27 // pred_check_branch
          %976 = sbr.rel (%p974) target = $region136
        $region135: #{tpu_custom_call.1} parent=27 // pred_region
          %s978 = ssub.s32 128, 128
          %979 = vsyncadd %s720, %s978
          %s980 = smul.addr %s23, 128
          %s981 = scalar_lea.hbm %s4, %s980
          %s983 = sshll.u32 %s723, 4
          %s984 = int_to_ptr.vmem [resolvable:$true] %s983
          %986 = dma.vmem_to_hbm [thread:$0]  %s984, 128, %s981, %s720
        $region136: #{tpu_custom_call.1} parent=27 // pred_fallthru
          _
      $region28: #{tpu_custom_call.1} parent=5 // pred_fallthru
        _
      %p987 = scmp.le.s32.totalorder 2, %s14
      // Predicated region
      $region137: #{tpu_custom_call.1} parent=5 // pred_check
        %p988 = pneg %p987
      $region138: #{tpu_custom_call.1} parent=5 // pred_check_branch
        %990 = sbr.rel (%p988) target = $region140
      $region139: #{tpu_custom_call.1} parent=5 // pred_region
        %s991 = ssub.s32 %s14, 2
        // Predicated region
        $region141: #{tpu_custom_call.1} parent=139 // pred_check
          %p992 = pneg %p119
        $region142: #{tpu_custom_call.1} parent=139 // pred_check_branch
          %994 = sbr.rel (%p992) target = $region144
        $region143: #{tpu_custom_call.1} parent=139 // pred_region
          %s995 = sand.u32 %s104, 1
          %s996 = sand.u32 %s104, 1
          %s997 = smul.addr %s996, 8
          %s998 = scalar_lea.vmem [#allocation7], %s997
        $region144: #{tpu_custom_call.1} parent=139 // pred_fallthru
          _
        // Predicated region
        $region145: #{tpu_custom_call.1} parent=139 // pred_check
          %p999 = pneg %p149
        $region146: #{tpu_custom_call.1} parent=139 // pred_check_branch
          %1001 = sbr.rel (%p999) target = $region148
        $region147: #{tpu_custom_call.1} parent=139 // pred_region
          %s1002 = sand.u32 %s134, 1
          %s1003 = sand.u32 %s134, 1
          %s1004 = smul.addr %s1003, 8
          %s1005 = scalar_lea.vmem [#allocation8], %s1004
        $region148: #{tpu_custom_call.1} parent=139 // pred_fallthru
          _
        // Predicated region
        $region149: #{tpu_custom_call.1} parent=139 // pred_check
          %p1006 = pneg %p175
        $region150: #{tpu_custom_call.1} parent=139 // pred_check_branch
          %1008 = sbr.rel (%p1006) target = $region152
        $region151: #{tpu_custom_call.1} parent=139 // pred_region
          %s1009 = sand.u32 %s160, 1
          %s1010 = scalar_lea.sflag [#allocation10], %s1009
          %s1011 = sand.u32 %s160, 1
          %s1012 = smul.addr %s1011, 8
          %s1013 = scalar_lea.vmem [#allocation9], %s1012
          %1014 = dma.done %s1010, 128
        $region152: #{tpu_custom_call.1} parent=139 // pred_fallthru
          _
      $region140: #{tpu_custom_call.1} parent=5 // pred_fallthru
        _
    $region6: #{tpu_custom_call.1} parent=1 // loop_footer
      %s18 = sadd.s32 1, %s14
    $region7: #{tpu_custom_call.1} parent=1 // loop_footer_branch
      %13 = sbr.rel target = $region3
    $region8: #{tpu_custom_call.1} parent=1 // loop_exit
      _
    %1015 = vsyncpa [#allocation10], 1
    %s1016 = scalar_lea.sflag [#allocation10], 1
    %1017 = vsyncpa %s1016, 1

</llo_original>
